<compile_context>
chip_gen: v7x
topology: tpu7x:2x2x1
jax: 0.10.0
libtpu: 0.0.40
codegen_flags: <defaults>
</compile_context>

<pallas_src>
import functools

import jax
import jax.numpy as jnp
import numpy as np
from jax.experimental import pallas as pl
from jax.experimental.pallas import tpu as pltpu


def bilstm_fc_kernel(x_ref, w_in_ref, b_in_ref, whh_f_ref, wfc_f_ref, wfc_b_ref,
                     bfc_ref, out_ref, *, T, B, B_pad, H):
    # x_ref    : (T*B_pad, D)  time-major, sublane-padded, flattened input
    # w_in_ref : (D, 8H)       [W_ih_fwd.T | W_ih_bwd.T]
    # b_in_ref : (1, 8H)       [b_ih_f + b_hh_f | b_ih_b + b_hh_b]
    # whh_f_ref: (H, 4H)       forward recurrent weight (transposed)
    # wfc_f_ref: (1, H), wfc_b_ref: (1, H), bfc_ref: (1, 1)
    # out_ref  : (B, 1)

    # Hoisted input projection for BOTH directions + bias fold: one MXU dot,
    # off the serial critical path.
    xw = (jnp.dot(x_ref[...], w_in_ref[...], preferred_element_type=jnp.float32)
          + b_in_ref[...])                                    # (T*B_pad, 8H)

    # NOTE: W_hh could additionally be staged in the MXU once across the
    # unrolled recurrence (matmul_push_rhs / matmul_acc_lhs); kept as jnp.dot
    # for portability across v5e/v6e/v7x.
    whh_f = whh_f_ref[...]

    def act_combine(gates, c):
        # gates: (B_pad, 4H) in PyTorch order [i | f | g | o].
        # sigmoid(x) = 0.5*(1 + tanh(x/2)): one EUP push for the full 128-lane
        # gate vector instead of exp + reciprocal; one more tanh for g.
        sg = 0.5 * (jnp.tanh(0.5 * gates) + 1.0)
        tg = jnp.tanh(gates)
        i = sg[:, 0 * H:1 * H]
        f = sg[:, 1 * H:2 * H]
        o = sg[:, 3 * H:4 * H]
        g = tg[:, 2 * H:3 * H]
        c_new = f * c + i * g
        h_new = o * jnp.tanh(c_new)
        return h_new, c_new

    c0 = jnp.zeros((B_pad, H), jnp.float32)

    # ---- Forward direction, fully unrolled (T is static & tiny). ----
    # t = 0 peeled: h0 == 0 => no h @ W_hh dot.
    h, c = act_combine(xw[0:B_pad, 0:4 * H], c0)
    for t in range(1, T):                    # static unroll; sublane-aligned slices
        gates = (xw[t * B_pad:(t + 1) * B_pad, 0:4 * H]
                 + jnp.dot(h, whh_f, preferred_element_type=jnp.float32))
        h, c = act_combine(gates, c)
    h_fwd_last = h                                            # (B_pad, H)

    # ---- Reverse direction output at position T-1: one cell step from a zero
    # state (PyTorch's reverse LSTM visits x[T-1] first) => no recurrent dot. ----
    h_bwd_at_last, _ = act_combine(xw[(T - 1) * B_pad:T * B_pad, 4 * H:8 * H], c0)

    # ---- fc (output_dim = 1): VPU multiply + lane reduction, no MXU tail and
    # no concatenate lane shuffle. ----
    logits = (jnp.sum(h_fwd_last * wfc_f_ref[...] + h_bwd_at_last * wfc_b_ref[...],
                      axis=-1, keepdims=True)
              + bfc_ref[...])                                 # (B_pad, 1)
    out_ref[...] = logits[0:B, :].astype(out_ref.dtype)


def prepare_params(params):
    """One-time fusion of PyTorch-shaped parameters into kernel operands.

    Done once at init (NOT in the per-call path): weight concatenation,
    transposition, bias folding and fc-weight splitting.
    """
    (w_ih_f, w_hh_f, b_ih_f, b_hh_f,
     w_ih_b, w_hh_b, b_ih_b, b_hh_b,
     w_fc, b_fc) = params
    H = w_hh_f.shape[1]
    O = w_fc.shape[0]
    assert O == 1, "fused VPU-reduction fc path assumes output_dim == 1"

    w_in = jnp.concatenate([w_ih_f.T, w_ih_b.T], axis=1)               # (D, 8H)
    b_in = jnp.concatenate([b_ih_f + b_hh_f, b_ih_b + b_hh_b]).reshape(1, 8 * H)
    whh_f_t = jnp.asarray(w_hh_f.T)                                    # (H, 4H)
    wfc_f = w_fc[:, :H].reshape(1, H)                                  # fc on h_fwd
    wfc_b = w_fc[:, H:].reshape(1, H)                                  # fc on h_bwd
    bfc = b_fc.reshape(1, 1)
    # NOTE: w_hh_b / b_*_b recurrent terms are not needed: only the reverse
    # output at t=T-1 is consumed, which is one step from a zero hidden state.
    fused = (w_in, b_in, whh_f_t, wfc_f, wfc_b, bfc)
    return tuple(jnp.asarray(a, jnp.float32) for a in fused)


@jax.jit
def bilstm_binary_classifier_forward(x, w_in, b_in, whh_f_t, wfc_f, wfc_b, bfc):
    """x: (B, T, D) float32; remaining args are the pre-fused tensors."""
    B, T, D = x.shape
    H = whh_f_t.shape[0]
    B_pad = ((B + 7) // 8) * 8            # round batch up to a full sublane tile

    # Time-major, sublane-padded, flattened: each timestep's rows are a
    # contiguous, (8,128)-aligned static slice inside the unrolled kernel.
    x_t = jnp.transpose(x, (1, 0, 2))                                  # (T, B, D)
    x_p = jnp.pad(x_t, ((0, 0), (0, B_pad - B), (0, 0)))               # (T, B_pad, D)
    x_flat = x_p.reshape(T * B_pad, D)

    kernel = functools.partial(bilstm_fc_kernel, T=T, B=B, B_pad=B_pad, H=H)
    vmem = pl.BlockSpec(memory_space=pltpu.MemorySpace.VMEM)
    return pl.pallas_call(
        kernel,
        out_shape=jax.ShapeDtypeStruct((B, 1), jnp.float32),
        in_specs=[vmem] * 7,
        out_specs=vmem,
    )(x_flat, w_in, b_in, whh_f_t, wfc_f, wfc_b, bfc)


def ref_forward(x, params):
    """Pure-JAX reference matching PyTorch BiLSTM + fc-on-last-timestep semantics."""
    (w_ih_f, w_hh_f, b_ih_f, b_hh_f,
     w_ih_b, w_hh_b, b_ih_b, b_hh_b,
     w_fc, b_fc) = params
    B, T, D = x.shape
    H = w_hh_f.shape[1]

    def cell(x_t, h, c, w_ih, w_hh, b):
        gates = x_t @ w_ih.T + h @ w_hh.T + b
        i = jax.nn.sigmoid(gates[:, :H])
        f = jax.nn.sigmoid(gates[:, H:2 * H])
        g = jnp.tanh(gates[:, 2 * H:3 * H])
        o = jax.nn.sigmoid(gates[:, 3 * H:])
        c = f * c + i * g
        h = o * jnp.tanh(c)
        return h, c

    h = jnp.zeros((B, H), jnp.float32)
    c = jnp.zeros((B, H), jnp.float32)
    for t in range(T):
        h, c = cell(x[:, t], h, c, w_ih_f, w_hh_f, b_ih_f + b_hh_f)
    h_fwd_last = h

    h = jnp.zeros((B, H), jnp.float32)
    c = jnp.zeros((B, H), jnp.float32)
    bwd_outs = []
    for t in range(T - 1, -1, -1):               # full reverse pass
        h, c = cell(x[:, t], h, c, w_ih_b, w_hh_b, b_ih_b + b_hh_b)
        bwd_outs.append(h)
    h_bwd_at_last = bwd_outs[0]                  # reverse-dir output at position T-1

    feat = jnp.concatenate([h_fwd_last, h_bwd_at_last], axis=-1)
    return feat @ w_fc.T + b_fc


if __name__ == "__main__":
    B, T, D, H, O = 2, 8, 16, 32, 1              # input_dim=16, hidden_dim=32, layer_dim=1

    key = jax.random.PRNGKey(0)
    keys = jax.random.split(key, 11)
    bound = 1.0 / np.sqrt(H)                     # PyTorch default uniform init scale

    def u(k_, shape):
        return jax.random.uniform(k_, shape, jnp.float32, -bound, bound)

    params = (
        u(keys[0], (4 * H, D)), u(keys[1], (4 * H, H)), u(keys[2], (4 * H,)), u(keys[3], (4 * H,)),
        u(keys[4], (4 * H, D)), u(keys[5], (4 * H, H)), u(keys[6], (4 * H,)), u(keys[7], (4 * H,)),
        u(keys[8], (O, 2 * H)), u(keys[9], (O,)),
    )
    x = jax.random.normal(keys[10], (B, T, D), jnp.float32)

    fused = prepare_params(params)               # one-time, outside the call path
    out = jax.block_until_ready(bilstm_binary_classifier_forward(x, *fused))
    ref = jax.block_until_ready(ref_forward(x, params))

    assert out.shape == (B, O), out.shape
    np.testing.assert_allclose(np.asarray(out), np.asarray(ref), rtol=1e-4, atol=1e-4)
    print("KERNEL_OK")
</pallas_src>

<mosaic_0001>
module attributes {stable_mosaic.version = 11 : i64} {
  func.func @bilstm_fc_kernel(%arg0: memref<64x16xf32, #tpu.memory_space<vmem>>, %arg1: memref<16x256xf32, #tpu.memory_space<vmem>>, %arg2: memref<1x256xf32, #tpu.memory_space<vmem>>, %arg3: memref<32x128xf32, #tpu.memory_space<vmem>>, %arg4: memref<1x32xf32, #tpu.memory_space<vmem>>, %arg5: memref<1x32xf32, #tpu.memory_space<vmem>>, %arg6: memref<1x1xf32, #tpu.memory_space<vmem>>, %arg7: memref<2x1xf32, #tpu.memory_space<vmem>>) attributes {dimension_semantics = [], scalar_prefetch = 0 : i64, scratch_operands = 0 : i64, tpu.core_type = #tpu.core_type<tc>} {
    %c0 = arith.constant 0 : index
    %c0_0 = arith.constant 0 : index
    %0 = vector.load %arg0[%c0, %c0_0] : memref<64x16xf32, #tpu.memory_space<vmem>>, vector<64x16xf32>
    %c0_1 = arith.constant 0 : index
    %c0_2 = arith.constant 0 : index
    %1 = vector.load %arg1[%c0_1, %c0_2] : memref<16x256xf32, #tpu.memory_space<vmem>>, vector<16x256xf32>
    %cst = arith.constant dense<0.000000e+00> : vector<64x256xf32>
    %2 = tpu.matmul %0, %1, %cst {dimension_numbers = #tpu.dot_dimension_numbers<[1], [0], [0], [1], [0, 0, 1, 1], [], []>} : vector<64x16xf32>, vector<16x256xf32>, vector<64x256xf32> -> vector<64x256xf32>
    %c0_3 = arith.constant 0 : index
    %c0_4 = arith.constant 0 : index
    %3 = vector.load %arg2[%c0_3, %c0_4] : memref<1x256xf32, #tpu.memory_space<vmem>>, vector<1x256xf32>
    %4 = vector.broadcast %3 : vector<1x256xf32> to vector<64x256xf32>
    %5 = arith.addf %2, %4 : vector<64x256xf32>
    %c0_5 = arith.constant 0 : index
    %c0_6 = arith.constant 0 : index
    %6 = vector.load %arg3[%c0_5, %c0_6] : memref<32x128xf32, #tpu.memory_space<vmem>>, vector<32x128xf32>
    %cst_7 = arith.constant 0.000000e+00 : f32
    %7 = vector.broadcast %cst_7 : f32 to vector<8x32xf32>
    %8 = vector.extract_strided_slice %5 {offsets = [0, 0], sizes = [8, 128], strides = [1, 1]} : vector<64x256xf32> to vector<8x128xf32>
    %cst_8 = arith.constant 5.000000e-01 : f32
    %9 = vector.broadcast %cst_8 : f32 to vector<8x128xf32>
    %10 = arith.mulf %9, %8 : vector<8x128xf32>
    %11 = math.tanh %10 : vector<8x128xf32>
    %cst_9 = arith.constant 1.000000e+00 : f32
    %12 = vector.broadcast %cst_9 : f32 to vector<8x128xf32>
    %13 = arith.addf %11, %12 : vector<8x128xf32>
    %cst_10 = arith.constant 5.000000e-01 : f32
    %14 = vector.broadcast %cst_10 : f32 to vector<8x128xf32>
    %15 = arith.mulf %14, %13 : vector<8x128xf32>
    %16 = math.tanh %8 : vector<8x128xf32>
    %17 = vector.extract_strided_slice %15 {offsets = [0, 0], sizes = [8, 32], strides = [1, 1]} : vector<8x128xf32> to vector<8x32xf32>
    %18 = vector.extract_strided_slice %15 {offsets = [0, 32], sizes = [8, 32], strides = [1, 1]} : vector<8x128xf32> to vector<8x32xf32>
    %19 = vector.extract_strided_slice %15 {offsets = [0, 96], sizes = [8, 32], strides = [1, 1]} : vector<8x128xf32> to vector<8x32xf32>
    %20 = vector.extract_strided_slice %16 {offsets = [0, 64], sizes = [8, 32], strides = [1, 1]} : vector<8x128xf32> to vector<8x32xf32>
    %21 = arith.mulf %18, %7 : vector<8x32xf32>
    %22 = arith.mulf %17, %20 : vector<8x32xf32>
    %23 = arith.addf %21, %22 : vector<8x32xf32>
    %24 = math.tanh %23 : vector<8x32xf32>
    %25 = arith.mulf %19, %24 : vector<8x32xf32>
    %26 = vector.extract_strided_slice %5 {offsets = [8, 0], sizes = [8, 128], strides = [1, 1]} : vector<64x256xf32> to vector<8x128xf32>
    %cst_11 = arith.constant dense<0.000000e+00> : vector<8x128xf32>
    %27 = tpu.matmul %25, %6, %cst_11 {dimension_numbers = #tpu.dot_dimension_numbers<[1], [0], [0], [1], [0, 0, 1, 1], [], []>} : vector<8x32xf32>, vector<32x128xf32>, vector<8x128xf32> -> vector<8x128xf32>
    %28 = arith.addf %26, %27 : vector<8x128xf32>
    %cst_12 = arith.constant 5.000000e-01 : f32
    %29 = vector.broadcast %cst_12 : f32 to vector<8x128xf32>
    %30 = arith.mulf %29, %28 : vector<8x128xf32>
    %31 = math.tanh %30 : vector<8x128xf32>
    %cst_13 = arith.constant 1.000000e+00 : f32
    %32 = vector.broadcast %cst_13 : f32 to vector<8x128xf32>
    %33 = arith.addf %31, %32 : vector<8x128xf32>
    %cst_14 = arith.constant 5.000000e-01 : f32
    %34 = vector.broadcast %cst_14 : f32 to vector<8x128xf32>
    %35 = arith.mulf %34, %33 : vector<8x128xf32>
    %36 = math.tanh %28 : vector<8x128xf32>
    %37 = vector.extract_strided_slice %35 {offsets = [0, 0], sizes = [8, 32], strides = [1, 1]} : vector<8x128xf32> to vector<8x32xf32>
    %38 = vector.extract_strided_slice %35 {offsets = [0, 32], sizes = [8, 32], strides = [1, 1]} : vector<8x128xf32> to vector<8x32xf32>
    %39 = vector.extract_strided_slice %35 {offsets = [0, 96], sizes = [8, 32], strides = [1, 1]} : vector<8x128xf32> to vector<8x32xf32>
    %40 = vector.extract_strided_slice %36 {offsets = [0, 64], sizes = [8, 32], strides = [1, 1]} : vector<8x128xf32> to vector<8x32xf32>
    %41 = arith.mulf %38, %23 : vector<8x32xf32>
    %42 = arith.mulf %37, %40 : vector<8x32xf32>
    %43 = arith.addf %41, %42 : vector<8x32xf32>
    %44 = math.tanh %43 : vector<8x32xf32>
    %45 = arith.mulf %39, %44 : vector<8x32xf32>
    %46 = vector.extract_strided_slice %5 {offsets = [16, 0], sizes = [8, 128], strides = [1, 1]} : vector<64x256xf32> to vector<8x128xf32>
    %cst_15 = arith.constant dense<0.000000e+00> : vector<8x128xf32>
    %47 = tpu.matmul %45, %6, %cst_15 {dimension_numbers = #tpu.dot_dimension_numbers<[1], [0], [0], [1], [0, 0, 1, 1], [], []>} : vector<8x32xf32>, vector<32x128xf32>, vector<8x128xf32> -> vector<8x128xf32>
    %48 = arith.addf %46, %47 : vector<8x128xf32>
    %cst_16 = arith.constant 5.000000e-01 : f32
    %49 = vector.broadcast %cst_16 : f32 to vector<8x128xf32>
    %50 = arith.mulf %49, %48 : vector<8x128xf32>
    %51 = math.tanh %50 : vector<8x128xf32>
    %cst_17 = arith.constant 1.000000e+00 : f32
    %52 = vector.broadcast %cst_17 : f32 to vector<8x128xf32>
    %53 = arith.addf %51, %52 : vector<8x128xf32>
    %cst_18 = arith.constant 5.000000e-01 : f32
    %54 = vector.broadcast %cst_18 : f32 to vector<8x128xf32>
    %55 = arith.mulf %54, %53 : vector<8x128xf32>
    %56 = math.tanh %48 : vector<8x128xf32>
    %57 = vector.extract_strided_slice %55 {offsets = [0, 0], sizes = [8, 32], strides = [1, 1]} : vector<8x128xf32> to vector<8x32xf32>
    %58 = vector.extract_strided_slice %55 {offsets = [0, 32], sizes = [8, 32], strides = [1, 1]} : vector<8x128xf32> to vector<8x32xf32>
    %59 = vector.extract_strided_slice %55 {offsets = [0, 96], sizes = [8, 32], strides = [1, 1]} : vector<8x128xf32> to vector<8x32xf32>
    %60 = vector.extract_strided_slice %56 {offsets = [0, 64], sizes = [8, 32], strides = [1, 1]} : vector<8x128xf32> to vector<8x32xf32>
    %61 = arith.mulf %58, %43 : vector<8x32xf32>
    %62 = arith.mulf %57, %60 : vector<8x32xf32>
    %63 = arith.addf %61, %62 : vector<8x32xf32>
    %64 = math.tanh %63 : vector<8x32xf32>
    %65 = arith.mulf %59, %64 : vector<8x32xf32>
    %66 = vector.extract_strided_slice %5 {offsets = [24, 0], sizes = [8, 128], strides = [1, 1]} : vector<64x256xf32> to vector<8x128xf32>
    %cst_19 = arith.constant dense<0.000000e+00> : vector<8x128xf32>
    %67 = tpu.matmul %65, %6, %cst_19 {dimension_numbers = #tpu.dot_dimension_numbers<[1], [0], [0], [1], [0, 0, 1, 1], [], []>} : vector<8x32xf32>, vector<32x128xf32>, vector<8x128xf32> -> vector<8x128xf32>
    %68 = arith.addf %66, %67 : vector<8x128xf32>
    %cst_20 = arith.constant 5.000000e-01 : f32
    %69 = vector.broadcast %cst_20 : f32 to vector<8x128xf32>
    %70 = arith.mulf %69, %68 : vector<8x128xf32>
    %71 = math.tanh %70 : vector<8x128xf32>
    %cst_21 = arith.constant 1.000000e+00 : f32
    %72 = vector.broadcast %cst_21 : f32 to vector<8x128xf32>
    %73 = arith.addf %71, %72 : vector<8x128xf32>
    %cst_22 = arith.constant 5.000000e-01 : f32
    %74 = vector.broadcast %cst_22 : f32 to vector<8x128xf32>
    %75 = arith.mulf %74, %73 : vector<8x128xf32>
    %76 = math.tanh %68 : vector<8x128xf32>
    %77 = vector.extract_strided_slice %75 {offsets = [0, 0], sizes = [8, 32], strides = [1, 1]} : vector<8x128xf32> to vector<8x32xf32>
    %78 = vector.extract_strided_slice %75 {offsets = [0, 32], sizes = [8, 32], strides = [1, 1]} : vector<8x128xf32> to vector<8x32xf32>
    %79 = vector.extract_strided_slice %75 {offsets = [0, 96], sizes = [8, 32], strides = [1, 1]} : vector<8x128xf32> to vector<8x32xf32>
    %80 = vector.extract_strided_slice %76 {offsets = [0, 64], sizes = [8, 32], strides = [1, 1]} : vector<8x128xf32> to vector<8x32xf32>
    %81 = arith.mulf %78, %63 : vector<8x32xf32>
    %82 = arith.mulf %77, %80 : vector<8x32xf32>
    %83 = arith.addf %81, %82 : vector<8x32xf32>
    %84 = math.tanh %83 : vector<8x32xf32>
    %85 = arith.mulf %79, %84 : vector<8x32xf32>
    %86 = vector.extract_strided_slice %5 {offsets = [32, 0], sizes = [8, 128], strides = [1, 1]} : vector<64x256xf32> to vector<8x128xf32>
    %cst_23 = arith.constant dense<0.000000e+00> : vector<8x128xf32>
    %87 = tpu.matmul %85, %6, %cst_23 {dimension_numbers = #tpu.dot_dimension_numbers<[1], [0], [0], [1], [0, 0, 1, 1], [], []>} : vector<8x32xf32>, vector<32x128xf32>, vector<8x128xf32> -> vector<8x128xf32>
    %88 = arith.addf %86, %87 : vector<8x128xf32>
    %cst_24 = arith.constant 5.000000e-01 : f32
    %89 = vector.broadcast %cst_24 : f32 to vector<8x128xf32>
    %90 = arith.mulf %89, %88 : vector<8x128xf32>
    %91 = math.tanh %90 : vector<8x128xf32>
    %cst_25 = arith.constant 1.000000e+00 : f32
    %92 = vector.broadcast %cst_25 : f32 to vector<8x128xf32>
    %93 = arith.addf %91, %92 : vector<8x128xf32>
    %cst_26 = arith.constant 5.000000e-01 : f32
    %94 = vector.broadcast %cst_26 : f32 to vector<8x128xf32>
    %95 = arith.mulf %94, %93 : vector<8x128xf32>
    %96 = math.tanh %88 : vector<8x128xf32>
    %97 = vector.extract_strided_slice %95 {offsets = [0, 0], sizes = [8, 32], strides = [1, 1]} : vector<8x128xf32> to vector<8x32xf32>
    %98 = vector.extract_strided_slice %95 {offsets = [0, 32], sizes = [8, 32], strides = [1, 1]} : vector<8x128xf32> to vector<8x32xf32>
    %99 = vector.extract_strided_slice %95 {offsets = [0, 96], sizes = [8, 32], strides = [1, 1]} : vector<8x128xf32> to vector<8x32xf32>
    %100 = vector.extract_strided_slice %96 {offsets = [0, 64], sizes = [8, 32], strides = [1, 1]} : vector<8x128xf32> to vector<8x32xf32>
    %101 = arith.mulf %98, %83 : vector<8x32xf32>
    %102 = arith.mulf %97, %100 : vector<8x32xf32>
    %103 = arith.addf %101, %102 : vector<8x32xf32>
    %104 = math.tanh %103 : vector<8x32xf32>
    %105 = arith.mulf %99, %104 : vector<8x32xf32>
    %106 = vector.extract_strided_slice %5 {offsets = [40, 0], sizes = [8, 128], strides = [1, 1]} : vector<64x256xf32> to vector<8x128xf32>
    %cst_27 = arith.constant dense<0.000000e+00> : vector<8x128xf32>
    %107 = tpu.matmul %105, %6, %cst_27 {dimension_numbers = #tpu.dot_dimension_numbers<[1], [0], [0], [1], [0, 0, 1, 1], [], []>} : vector<8x32xf32>, vector<32x128xf32>, vector<8x128xf32> -> vector<8x128xf32>
    %108 = arith.addf %106, %107 : vector<8x128xf32>
    %cst_28 = arith.constant 5.000000e-01 : f32
    %109 = vector.broadcast %cst_28 : f32 to vector<8x128xf32>
    %110 = arith.mulf %109, %108 : vector<8x128xf32>
    %111 = math.tanh %110 : vector<8x128xf32>
    %cst_29 = arith.constant 1.000000e+00 : f32
    %112 = vector.broadcast %cst_29 : f32 to vector<8x128xf32>
    %113 = arith.addf %111, %112 : vector<8x128xf32>
    %cst_30 = arith.constant 5.000000e-01 : f32
    %114 = vector.broadcast %cst_30 : f32 to vector<8x128xf32>
    %115 = arith.mulf %114, %113 : vector<8x128xf32>
    %116 = math.tanh %108 : vector<8x128xf32>
    %117 = vector.extract_strided_slice %115 {offsets = [0, 0], sizes = [8, 32], strides = [1, 1]} : vector<8x128xf32> to vector<8x32xf32>
    %118 = vector.extract_strided_slice %115 {offsets = [0, 32], sizes = [8, 32], strides = [1, 1]} : vector<8x128xf32> to vector<8x32xf32>
    %119 = vector.extract_strided_slice %115 {offsets = [0, 96], sizes = [8, 32], strides = [1, 1]} : vector<8x128xf32> to vector<8x32xf32>
    %120 = vector.extract_strided_slice %116 {offsets = [0, 64], sizes = [8, 32], strides = [1, 1]} : vector<8x128xf32> to vector<8x32xf32>
    %121 = arith.mulf %118, %103 : vector<8x32xf32>
    %122 = arith.mulf %117, %120 : vector<8x32xf32>
    %123 = arith.addf %121, %122 : vector<8x32xf32>
    %124 = math.tanh %123 : vector<8x32xf32>
    %125 = arith.mulf %119, %124 : vector<8x32xf32>
    %126 = vector.extract_strided_slice %5 {offsets = [48, 0], sizes = [8, 128], strides = [1, 1]} : vector<64x256xf32> to vector<8x128xf32>
    %cst_31 = arith.constant dense<0.000000e+00> : vector<8x128xf32>
    %127 = tpu.matmul %125, %6, %cst_31 {dimension_numbers = #tpu.dot_dimension_numbers<[1], [0], [0], [1], [0, 0, 1, 1], [], []>} : vector<8x32xf32>, vector<32x128xf32>, vector<8x128xf32> -> vector<8x128xf32>
    %128 = arith.addf %126, %127 : vector<8x128xf32>
    %cst_32 = arith.constant 5.000000e-01 : f32
    %129 = vector.broadcast %cst_32 : f32 to vector<8x128xf32>
    %130 = arith.mulf %129, %128 : vector<8x128xf32>
    %131 = math.tanh %130 : vector<8x128xf32>
    %cst_33 = arith.constant 1.000000e+00 : f32
    %132 = vector.broadcast %cst_33 : f32 to vector<8x128xf32>
    %133 = arith.addf %131, %132 : vector<8x128xf32>
    %cst_34 = arith.constant 5.000000e-01 : f32
    %134 = vector.broadcast %cst_34 : f32 to vector<8x128xf32>
    %135 = arith.mulf %134, %133 : vector<8x128xf32>
    %136 = math.tanh %128 : vector<8x128xf32>
    %137 = vector.extract_strided_slice %135 {offsets = [0, 0], sizes = [8, 32], strides = [1, 1]} : vector<8x128xf32> to vector<8x32xf32>
    %138 = vector.extract_strided_slice %135 {offsets = [0, 32], sizes = [8, 32], strides = [1, 1]} : vector<8x128xf32> to vector<8x32xf32>
    %139 = vector.extract_strided_slice %135 {offsets = [0, 96], sizes = [8, 32], strides = [1, 1]} : vector<8x128xf32> to vector<8x32xf32>
    %140 = vector.extract_strided_slice %136 {offsets = [0, 64], sizes = [8, 32], strides = [1, 1]} : vector<8x128xf32> to vector<8x32xf32>
    %141 = arith.mulf %138, %123 : vector<8x32xf32>
    %142 = arith.mulf %137, %140 : vector<8x32xf32>
    %143 = arith.addf %141, %142 : vector<8x32xf32>
    %144 = math.tanh %143 : vector<8x32xf32>
    %145 = arith.mulf %139, %144 : vector<8x32xf32>
    %146 = vector.extract_strided_slice %5 {offsets = [56, 0], sizes = [8, 128], strides = [1, 1]} : vector<64x256xf32> to vector<8x128xf32>
    %cst_35 = arith.constant dense<0.000000e+00> : vector<8x128xf32>
    %147 = tpu.matmul %145, %6, %cst_35 {dimension_numbers = #tpu.dot_dimension_numbers<[1], [0], [0], [1], [0, 0, 1, 1], [], []>} : vector<8x32xf32>, vector<32x128xf32>, vector<8x128xf32> -> vector<8x128xf32>
    %148 = arith.addf %146, %147 : vector<8x128xf32>
    %cst_36 = arith.constant 5.000000e-01 : f32
    %149 = vector.broadcast %cst_36 : f32 to vector<8x128xf32>
    %150 = arith.mulf %149, %148 : vector<8x128xf32>
    %151 = math.tanh %150 : vector<8x128xf32>
    %cst_37 = arith.constant 1.000000e+00 : f32
    %152 = vector.broadcast %cst_37 : f32 to vector<8x128xf32>
    %153 = arith.addf %151, %152 : vector<8x128xf32>
    %cst_38 = arith.constant 5.000000e-01 : f32
    %154 = vector.broadcast %cst_38 : f32 to vector<8x128xf32>
    %155 = arith.mulf %154, %153 : vector<8x128xf32>
    %156 = math.tanh %148 : vector<8x128xf32>
    %157 = vector.extract_strided_slice %155 {offsets = [0, 0], sizes = [8, 32], strides = [1, 1]} : vector<8x128xf32> to vector<8x32xf32>
    %158 = vector.extract_strided_slice %155 {offsets = [0, 32], sizes = [8, 32], strides = [1, 1]} : vector<8x128xf32> to vector<8x32xf32>
    %159 = vector.extract_strided_slice %155 {offsets = [0, 96], sizes = [8, 32], strides = [1, 1]} : vector<8x128xf32> to vector<8x32xf32>
    %160 = vector.extract_strided_slice %156 {offsets = [0, 64], sizes = [8, 32], strides = [1, 1]} : vector<8x128xf32> to vector<8x32xf32>
    %161 = arith.mulf %158, %143 : vector<8x32xf32>
    %162 = arith.mulf %157, %160 : vector<8x32xf32>
    %163 = arith.addf %161, %162 : vector<8x32xf32>
    %164 = math.tanh %163 : vector<8x32xf32>
    %165 = arith.mulf %159, %164 : vector<8x32xf32>
    %166 = vector.extract_strided_slice %5 {offsets = [56, 128], sizes = [8, 128], strides = [1, 1]} : vector<64x256xf32> to vector<8x128xf32>
    %cst_39 = arith.constant 5.000000e-01 : f32
    %167 = vector.broadcast %cst_39 : f32 to vector<8x128xf32>
    %168 = arith.mulf %167, %166 : vector<8x128xf32>
    %169 = math.tanh %168 : vector<8x128xf32>
    %cst_40 = arith.constant 1.000000e+00 : f32
    %170 = vector.broadcast %cst_40 : f32 to vector<8x128xf32>
    %171 = arith.addf %169, %170 : vector<8x128xf32>
    %cst_41 = arith.constant 5.000000e-01 : f32
    %172 = vector.broadcast %cst_41 : f32 to vector<8x128xf32>
    %173 = arith.mulf %172, %171 : vector<8x128xf32>
    %174 = math.tanh %166 : vector<8x128xf32>
    %175 = vector.extract_strided_slice %173 {offsets = [0, 0], sizes = [8, 32], strides = [1, 1]} : vector<8x128xf32> to vector<8x32xf32>
    %176 = vector.extract_strided_slice %173 {offsets = [0, 32], sizes = [8, 32], strides = [1, 1]} : vector<8x128xf32> to vector<8x32xf32>
    %177 = vector.extract_strided_slice %173 {offsets = [0, 96], sizes = [8, 32], strides = [1, 1]} : vector<8x128xf32> to vector<8x32xf32>
    %178 = vector.extract_strided_slice %174 {offsets = [0, 64], sizes = [8, 32], strides = [1, 1]} : vector<8x128xf32> to vector<8x32xf32>
    %179 = arith.mulf %176, %7 : vector<8x32xf32>
    %180 = arith.mulf %175, %178 : vector<8x32xf32>
    %181 = arith.addf %179, %180 : vector<8x32xf32>
    %182 = math.tanh %181 : vector<8x32xf32>
    %183 = arith.mulf %177, %182 : vector<8x32xf32>
    %c0_42 = arith.constant 0 : index
    %c0_43 = arith.constant 0 : index
    %184 = vector.load %arg4[%c0_42, %c0_43] : memref<1x32xf32, #tpu.memory_space<vmem>>, vector<1x32xf32>
    %185 = vector.broadcast %184 : vector<1x32xf32> to vector<8x32xf32>
    %186 = arith.mulf %165, %185 : vector<8x32xf32>
    %c0_44 = arith.constant 0 : index
    %c0_45 = arith.constant 0 : index
    %187 = vector.load %arg5[%c0_44, %c0_45] : memref<1x32xf32, #tpu.memory_space<vmem>>, vector<1x32xf32>
    %188 = vector.broadcast %187 : vector<1x32xf32> to vector<8x32xf32>
    %189 = arith.mulf %183, %188 : vector<8x32xf32>
    %190 = arith.addf %186, %189 : vector<8x32xf32>
    %cst_46 = arith.constant dense<0.000000e+00> : vector<8xf32>
    %191 = vector.multi_reduction <add>, %190, %cst_46 [1] : vector<8x32xf32> to vector<8xf32>
    %192 = vector.shape_cast %191 : vector<8xf32> to vector<8x1xf32>
    %c0_47 = arith.constant 0 : index
    %c0_48 = arith.constant 0 : index
    %193 = vector.load %arg6[%c0_47, %c0_48] : memref<1x1xf32, #tpu.memory_space<vmem>>, vector<1x1xf32>
    %194 = vector.broadcast %193 : vector<1x1xf32> to vector<8x1xf32>
    %195 = arith.addf %192, %194 : vector<8x1xf32>
    %196 = vector.extract_strided_slice %195 {offsets = [0, 0], sizes = [2, 1], strides = [1, 1]} : vector<8x1xf32> to vector<2x1xf32>
    %c0_49 = arith.constant 0 : index
    %c0_50 = arith.constant 0 : index
    %197 = vector.load %arg7[%c0_49, %c0_50] : memref<2x1xf32, #tpu.memory_space<vmem>>, vector<2x1xf32>
    tpu.vector_store %arg7[%c0_49, %c0_50], %196 {strides = array<i32>} : memref<2x1xf32, #tpu.memory_space<vmem>>, vector<2x1xf32>,
    return
  }
}

</mosaic_0001>

<llo_original>
// kernel: bilstm_binary_classifier_forward.1
$region0: #{bilstm_binary_classifier_forward.1}
  #allocation0 [shape = 'u32[]', space=smem, size = 0x4, offset = 0x4, fixed_abs, tag = 'smem constant byte address 0x4 - core index']
  #allocation1 [shape = 'u32[144,128]{1,0:T(1,128)}', space=vmem, size = 0x12000, scoped, tag = 'internal scratch']
  #allocation2 [shape = 'f32[1,1]{1,0:T(1,128)S(1)}', space=vmem, size = 0x200, scoped, tag = 'scoped memory for bilstm_binary_classifier_forward.1']
  %s0 = inlined_call_operand.vmem [shape: f32[64,16], index: 0, kind: input, shape index: {}]
  %s1 = inlined_call_operand.vmem [shape: f32[16,256], index: 1, kind: input, shape index: {}]
  %s2 = inlined_call_operand.vmem [shape: f32[1,256], index: 2, kind: input, shape index: {}]
  %s3 = inlined_call_operand.vmem [shape: f32[32,128], index: 3, kind: input, shape index: {}]
  %s4 = inlined_call_operand.vmem [shape: f32[1,32], index: 4, kind: input, shape index: {}]
  %s5 = inlined_call_operand.vmem [shape: f32[1,32], index: 5, kind: input, shape index: {}]
  %s6 = inlined_call_operand.<no memory space> [shape: f32[1,1], index: 6, kind: input, shape index: {}]
  %s7 = inlined_call_operand.vmem [shape: f32[2,1], index: 7, kind: output, shape index: {}]
  %s8 = sld [smem:[#allocation0]]
  $region38: #{bilstm_binary_classifier_forward.1} parent=0
    _
  %s10 = ssub.s32 1, %s8
  %s11 = scalar_select 0, %s10, %s8
  %v12 = vstv %s6
  %13 = vst [vmem:[#allocation2] sm:$0x1] %v12
  // Predicated region
  $region2: #{bilstm_binary_classifier_forward.1} parent=0 // pred_check
    _
  $region3: #{bilstm_binary_classifier_forward.1} parent=0 // pred_check_branch
    %15 = sbr.rel (0) target = $region5
  $region4: #{bilstm_binary_classifier_forward.1} parent=0 // pred_region
    _
  $region5: #{bilstm_binary_classifier_forward.1} parent=0 // pred_fallthru
    _
  // Predicated region
  $region6: #{bilstm_binary_classifier_forward.1} parent=0 // pred_check
    _
  $region7: #{bilstm_binary_classifier_forward.1} parent=0 // pred_check_branch
    %17 = sbr.rel (0) target = $region9
  $region8: #{bilstm_binary_classifier_forward.1} parent=0 // pred_region
    _
  $region9: #{bilstm_binary_classifier_forward.1} parent=0 // pred_fallthru
    _
  // Predicated region
  $region10: #{bilstm_binary_classifier_forward.1} parent=0 // pred_check
    _
  $region11: #{bilstm_binary_classifier_forward.1} parent=0 // pred_check_branch
    %19 = sbr.rel (0) target = $region13
  $region12: #{bilstm_binary_classifier_forward.1} parent=0 // pred_region
    _
  $region13: #{bilstm_binary_classifier_forward.1} parent=0 // pred_fallthru
    _
  // Predicated region
  $region14: #{bilstm_binary_classifier_forward.1} parent=0 // pred_check
    _
  $region15: #{bilstm_binary_classifier_forward.1} parent=0 // pred_check_branch
    %21 = sbr.rel (0) target = $region17
  $region16: #{bilstm_binary_classifier_forward.1} parent=0 // pred_region
    _
  $region17: #{bilstm_binary_classifier_forward.1} parent=0 // pred_fallthru
    _
  // Predicated region
  $region18: #{bilstm_binary_classifier_forward.1} parent=0 // pred_check
    _
  $region19: #{bilstm_binary_classifier_forward.1} parent=0 // pred_check_branch
    %23 = sbr.rel (0) target = $region21
  $region20: #{bilstm_binary_classifier_forward.1} parent=0 // pred_region
    _
  $region21: #{bilstm_binary_classifier_forward.1} parent=0 // pred_fallthru
    _
  // Predicated region
  $region22: #{bilstm_binary_classifier_forward.1} parent=0 // pred_check
    _
  $region23: #{bilstm_binary_classifier_forward.1} parent=0 // pred_check_branch
    %25 = sbr.rel (0) target = $region25
  $region24: #{bilstm_binary_classifier_forward.1} parent=0 // pred_region
    _
  $region25: #{bilstm_binary_classifier_forward.1} parent=0 // pred_fallthru
    _
  // Predicated region
  $region26: #{bilstm_binary_classifier_forward.1} parent=0 // pred_check
    _
  $region27: #{bilstm_binary_classifier_forward.1} parent=0 // pred_check_branch
    %27 = sbr.rel (0) target = $region29
  $region28: #{bilstm_binary_classifier_forward.1} parent=0 // pred_region
    _
  $region29: #{bilstm_binary_classifier_forward.1} parent=0 // pred_fallthru
    _
  %v28 = vld [vmem:[%s0] sm:$0xff]
  %v29 = vld [vmem:[%s0 + $0x8] sm:$0xff]
  %v30 = vld [vmem:[%s0 + $0x10] sm:$0xff]
  %v31 = vld [vmem:[%s0 + $0x18] sm:$0xff]
  %v32 = vld [vmem:[%s0 + $0x20] sm:$0xff]
  %v33 = vld [vmem:[%s0 + $0x28] sm:$0xff]
  %v34 = vld [vmem:[%s0 + $0x30] sm:$0xff]
  %v35 = vld [vmem:[%s0 + $0x38] sm:$0xff]
  %v36 = vld [vmem:[%s1] sm:$0xff]
  %v37 = vld [vmem:[%s1 + $0x8] sm:$0xff]
  %v38 = vld [vmem:[%s1 + $0x10] sm:$0xff]
  %v39 = vld [vmem:[%s1 + $0x18] sm:$0xff]
  %v40 = vld [vmem:[%s2] sm:$0x3]
  %v42 = vlaneseq
  %v43 = vshrl.u32 %v42, 7
  %v44 = vsub.s32 0, %v43
  %v45 = vrot.slane %v40, %v44
  %v46 = vlaneseq
  %v47 = vshrl.u32 %v46, 7
  %v48 = vsub.s32 1, %v47
  %v49 = vrot.slane %v40, %v48
  %vm52 = vcmask 130048
  %v54 = vsel %vm52, %v28, 0
  %v57 = vsel %vm52, %v29, 0
  %v60 = vsel %vm52, %v30, 0
  %v63 = vsel %vm52, %v31, 0
  %v66 = vsel %vm52, %v32, 0
  %v69 = vsel %vm52, %v33, 0
  %v72 = vsel %vm52, %v34, 0
  %v75 = vsel %vm52, %v35, 0
  %77 = vmatprep.subr.mxu0 %v37
  %78 = vmatpush1.msra.mxu0 %v36
  %79 = vmatprep.subr.mxu0 %v39
  %80 = vmatpush1.msra.mxu0 %v38
  %81 = vmatprep.subr.mxu0 0.0
  %82 = vmatpush1.msra.mxu0 0.0
  %83 = vmatprep.subr.mxu0 0.0
  %84 = vmatpush1.msra.mxu0 0.0
  %85 = vmatprep.subr.mxu0 0.0
  %86 = vmatpush1.msra.mxu0 0.0
  %87 = vmatprep.subr.mxu0 0.0
  %88 = vmatpush1.msra.mxu0 0.0
  %89 = vmatprep.subr.mxu0 0.0
  %90 = vmatpush1.msra.mxu0 0.0
  %91 = vmatprep.subr.mxu0 0.0
  %92 = vmatpush1.msra.mxu0 0.0
  %93 = vmatprep.subr.mxu0 0.0
  %94 = vmatpush1.msra.mxu0 0.0
  %95 = vmatprep.subr.mxu0 0.0
  %96 = vmatpush1.msra.mxu0 0.0
  %97 = vmatprep.subr.mxu0 0.0
  %98 = vmatpush1.msra.mxu0 0.0
  %99 = vmatprep.subr.mxu0 0.0
  %100 = vmatpush1.msra.mxu0 0.0
  %101 = vmatprep.subr.mxu0 0.0
  %102 = vmatpush1.msra.mxu0 0.0
  %103 = vmatprep.subr.mxu0 0.0
  %104 = vmatpush1.msra.mxu0 0.0
  %105 = vmatprep.subr.mxu0 0.0
  %106 = vmatpush1.msra.mxu0 0.0
  %107 = vmatprep.subr.mxu0 0.0
  %108 = vmatpush1.msra.mxu0 0.0
  %109 = vmatprep.subr.mxu0 0.0
  %110 = vmatpush1.msra.mxu0 0.0
  %111 = vmatprep.subr.mxu0 0.0
  %112 = vmatpush1.msra.mxu0 0.0
  %113 = vmatprep.subr.mxu0 0.0
  %114 = vmatpush1.msra.mxu0 0.0
  %115 = vmatprep.subr.mxu0 0.0
  %116 = vmatpush1.msra.mxu0 0.0
  %117 = vmatprep.subr.mxu0 0.0
  %118 = vmatpush1.msra.mxu0 0.0
  %119 = vmatprep.subr.mxu0 0.0
  %120 = vmatpush1.msra.mxu0 0.0
  %121 = vmatprep.subr.mxu0 0.0
  %122 = vmatpush1.msra.mxu0 0.0
  %123 = vmatprep.subr.mxu0 0.0
  %124 = vmatpush1.msra.mxu0 0.0
  %125 = vmatprep.subr.mxu0 0.0
  %126 = vmatpush1.msra.mxu0 0.0
  %127 = vmatprep.subr.mxu0 0.0
  %128 = vmatpush1.msra.mxu0 0.0
  %129 = vmatprep.subr.mxu0 0.0
  %130 = vmatpush1.msra.mxu0 0.0
  %131 = vmatprep.subr.mxu0 0.0
  %132 = vmatpush1.msra.mxu0 0.0
  %133 = vmatprep.subr.mxu0 0.0
  %134 = vmatpush1.msra.mxu0 0.0
  %135 = vmatprep.subr.mxu0 0.0
  %136 = vmatpush1.msra.mxu0 0.0
  %137 = vmatprep.subr.mxu0 0.0
  %138 = vmatpush1.msra.mxu0 0.0
  %139 = vmatprep.subr.mxu0 0.0
  %140 = vmatpush1.msra.mxu0 0.0
  %141 = vmatprep.mubr.f32.mxu0 0.0
  %142 = vmatmul.mubr.f32.gmra.mrb[0].mxu0 %v54
  %v143 = vpop.f32.mrb[0].mxu0
  %v144 = vadd.f32 %v45, %v143
  %v145 = vpop.f32.mrb[0].mxu0
  %146 = vmatprep.mubr.f32.mxu0 0.0
  %147 = vmatmul.mubr.f32.gmra.mrb[0].mxu0 %v57
  %v148 = vpop.f32.mrb[0].mxu0
  %v149 = vadd.f32 %v45, %v148
  %v150 = vpop.f32.mrb[0].mxu0
  %151 = vmatprep.mubr.f32.mxu0 0.0
  %152 = vmatmul.mubr.f32.gmra.mrb[0].mxu0 %v60
  %v153 = vpop.f32.mrb[0].mxu0
  %v154 = vadd.f32 %v45, %v153
  %v155 = vpop.f32.mrb[0].mxu0
  %156 = vmatprep.mubr.f32.mxu0 0.0
  %157 = vmatmul.mubr.f32.gmra.mrb[0].mxu0 %v63
  %v158 = vpop.f32.mrb[0].mxu0
  %v159 = vadd.f32 %v45, %v158
  %v160 = vpop.f32.mrb[0].mxu0
  %161 = vmatprep.mubr.f32.mxu0 0.0
  %162 = vmatmul.mubr.f32.gmra.mrb[0].mxu0 %v66
  %v163 = vpop.f32.mrb[0].mxu0
  %v164 = vadd.f32 %v45, %v163
  %v165 = vpop.f32.mrb[0].mxu0
  %166 = vmatprep.mubr.f32.mxu0 0.0
  %167 = vmatmul.mubr.f32.gmra.mrb[0].mxu0 %v69
  %v168 = vpop.f32.mrb[0].mxu0
  %v169 = vadd.f32 %v45, %v168
  %v170 = vpop.f32.mrb[0].mxu0
  %171 = vmatprep.mubr.f32.mxu0 0.0
  %172 = vmatmul.mubr.f32.gmra.mrb[0].mxu0 %v72
  %v173 = vpop.f32.mrb[0].mxu0
  %v174 = vadd.f32 %v45, %v173
  %v175 = vpop.f32.mrb[0].mxu0
  %176 = vmatprep.mubr.f32.mxu0 0.0
  %177 = vmatmul.mubr.f32.gmra.mrb[0].mxu0 %v75
  %v178 = vpop.f32.mrb[0].mxu0
  %v179 = vadd.f32 %v45, %v178
  %v180 = vpop.f32.mrb[0].mxu0
  %v181 = vadd.f32 %v49, %v180
  %182 = vdwg.mxu0
  %v183 = vld [vmem:[%s3] sm:$0xff]
  %v184 = vld [vmem:[%s3 + $0x8] sm:$0xff]
  %v185 = vld [vmem:[%s3 + $0x10] sm:$0xff]
  %v186 = vld [vmem:[%s3 + $0x18] sm:$0xff]
  %v187 = vmul.f32 %v144, 0.5
  %v188 = vtanh.pop %v187
  %v189 = vadd.f32 %v188, 1.0
  %v190 = vmul.f32 %v189, 0.5
  %v191 = vtanh.pop %v144
  %v192 = vmul.f32 %v190, 0.0
  %194 = vrot.lane.b32.xlu0 %v191, 64
  %v195 = vpop.permute.xlu0 %194
  %v197 = vmul.f32 %v190, %v195
  %199 = vrot.lane.b32.xlu0 %v197, 32
  %v200 = vpop.permute.xlu0 %199
  %v202 = vadd.f32 %v192, %v200
  %v203 = vtanh.pop %v202
  %205 = vrot.lane.b32.xlu0 %v203, 64
  %v206 = vpop.permute.xlu0 %205
  %v208 = vmul.f32 %v190, %v206
  %210 = vrot.lane.b32.xlu0 %v208, 32
  %v211 = vpop.permute.xlu0 %210
  %vm212 = vcmask 261120
  %v213 = vsel %vm212, %v211, 0
  %215 = vmatprep.subr.mxu0 0.0
  %216 = vmatpush1.msra.mxu0 %v183
  %217 = vmatprep.subr.mxu0 0.0
  %218 = vmatpush1.msra.mxu0 %v184
  %219 = vmatprep.subr.mxu0 0.0
  %220 = vmatpush1.msra.mxu0 %v185
  %221 = vmatprep.subr.mxu0 0.0
  %222 = vmatpush1.msra.mxu0 %v186
  %223 = vmatprep.subr.mxu0 0.0
  %224 = vmatpush1.msra.mxu0 0.0
  %225 = vmatprep.subr.mxu0 0.0
  %226 = vmatpush1.msra.mxu0 0.0
  %227 = vmatprep.subr.mxu0 0.0
  %228 = vmatpush1.msra.mxu0 0.0
  %229 = vmatprep.subr.mxu0 0.0
  %230 = vmatpush1.msra.mxu0 0.0
  %231 = vmatprep.subr.mxu0 0.0
  %232 = vmatpush1.msra.mxu0 0.0
  %233 = vmatprep.subr.mxu0 0.0
  %234 = vmatpush1.msra.mxu0 0.0
  %235 = vmatprep.subr.mxu0 0.0
  %236 = vmatpush1.msra.mxu0 0.0
  %237 = vmatprep.subr.mxu0 0.0
  %238 = vmatpush1.msra.mxu0 0.0
  %239 = vmatprep.subr.mxu0 0.0
  %240 = vmatpush1.msra.mxu0 0.0
  %241 = vmatprep.subr.mxu0 0.0
  %242 = vmatpush1.msra.mxu0 0.0
  %243 = vmatprep.subr.mxu0 0.0
  %244 = vmatpush1.msra.mxu0 0.0
  %245 = vmatprep.subr.mxu0 0.0
  %246 = vmatpush1.msra.mxu0 0.0
  %247 = vmatprep.subr.mxu0 0.0
  %248 = vmatpush1.msra.mxu0 0.0
  %249 = vmatprep.subr.mxu0 0.0
  %250 = vmatpush1.msra.mxu0 0.0
  %251 = vmatprep.subr.mxu0 0.0
  %252 = vmatpush1.msra.mxu0 0.0
  %253 = vmatprep.subr.mxu0 0.0
  %254 = vmatpush1.msra.mxu0 0.0
  %255 = vmatprep.subr.mxu0 0.0
  %256 = vmatpush1.msra.mxu0 0.0
  %257 = vmatprep.subr.mxu0 0.0
  %258 = vmatpush1.msra.mxu0 0.0
  %259 = vmatprep.subr.mxu0 0.0
  %260 = vmatpush1.msra.mxu0 0.0
  %261 = vmatprep.subr.mxu0 0.0
  %262 = vmatpush1.msra.mxu0 0.0
  %263 = vmatprep.subr.mxu0 0.0
  %264 = vmatpush1.msra.mxu0 0.0
  %265 = vmatprep.subr.mxu0 0.0
  %266 = vmatpush1.msra.mxu0 0.0
  %267 = vmatprep.subr.mxu0 0.0
  %268 = vmatpush1.msra.mxu0 0.0
  %269 = vmatprep.subr.mxu0 0.0
  %270 = vmatpush1.msra.mxu0 0.0
  %271 = vmatprep.subr.mxu0 0.0
  %272 = vmatpush1.msra.mxu0 0.0
  %273 = vmatprep.subr.mxu0 0.0
  %274 = vmatpush1.msra.mxu0 0.0
  %275 = vmatprep.subr.mxu0 0.0
  %276 = vmatpush1.msra.mxu0 0.0
  %277 = vmatprep.subr.mxu0 0.0
  %278 = vmatpush1.msra.mxu0 0.0
  %279 = vmatprep.mubr.f32.mxu0 0.0
  %280 = vmatmul.mubr.f32.gmra.mrb[0].mxu0 %v213
  %v281 = vpop.f32.mrb[0].mxu0
  %v282 = vadd.f32 0.0, %v281
  %v283 = vpop.f32.mrb[0].mxu0
  %284 = vdwg.mxu0
  %v285 = vadd.f32 %v149, %v282
  %v286 = vmul.f32 %v285, 0.5
  %v287 = vtanh.pop %v286
  %v288 = vadd.f32 %v287, 1.0
  %v289 = vmul.f32 %v288, 0.5
  %v290 = vtanh.pop %v285
  %v291 = vmul.f32 %v289, %v202
  %293 = vrot.lane.b32.xlu0 %v290, 64
  %v294 = vpop.permute.xlu0 %293
  %v296 = vmul.f32 %v289, %v294
  %298 = vrot.lane.b32.xlu0 %v296, 32
  %v299 = vpop.permute.xlu0 %298
  %v301 = vadd.f32 %v291, %v299
  %v302 = vtanh.pop %v301
  %304 = vrot.lane.b32.xlu0 %v302, 64
  %v305 = vpop.permute.xlu0 %304
  %v307 = vmul.f32 %v289, %v305
  %309 = vrot.lane.b32.xlu0 %v307, 32
  %v310 = vpop.permute.xlu0 %309
  %v311 = vsel %vm212, %v310, 0
  %313 = vmatprep.subr.mxu0 0.0
  %314 = vmatpush1.msra.mxu0 %v183
  %315 = vmatprep.subr.mxu0 0.0
  %316 = vmatpush1.msra.mxu0 %v184
  %317 = vmatprep.subr.mxu0 0.0
  %318 = vmatpush1.msra.mxu0 %v185
  %319 = vmatprep.subr.mxu0 0.0
  %320 = vmatpush1.msra.mxu0 %v186
  %321 = vmatprep.subr.mxu0 0.0
  %322 = vmatpush1.msra.mxu0 0.0
  %323 = vmatprep.subr.mxu0 0.0
  %324 = vmatpush1.msra.mxu0 0.0
  %325 = vmatprep.subr.mxu0 0.0
  %326 = vmatpush1.msra.mxu0 0.0
  %327 = vmatprep.subr.mxu0 0.0
  %328 = vmatpush1.msra.mxu0 0.0
  %329 = vmatprep.subr.mxu0 0.0
  %330 = vmatpush1.msra.mxu0 0.0
  %331 = vmatprep.subr.mxu0 0.0
  %332 = vmatpush1.msra.mxu0 0.0
  %333 = vmatprep.subr.mxu0 0.0
  %334 = vmatpush1.msra.mxu0 0.0
  %335 = vmatprep.subr.mxu0 0.0
  %336 = vmatpush1.msra.mxu0 0.0
  %337 = vmatprep.subr.mxu0 0.0
  %338 = vmatpush1.msra.mxu0 0.0
  %339 = vmatprep.subr.mxu0 0.0
  %340 = vmatpush1.msra.mxu0 0.0
  %341 = vmatprep.subr.mxu0 0.0
  %342 = vmatpush1.msra.mxu0 0.0
  %343 = vmatprep.subr.mxu0 0.0
  %344 = vmatpush1.msra.mxu0 0.0
  %345 = vmatprep.subr.mxu0 0.0
  %346 = vmatpush1.msra.mxu0 0.0
  %347 = vmatprep.subr.mxu0 0.0
  %348 = vmatpush1.msra.mxu0 0.0
  %349 = vmatprep.subr.mxu0 0.0
  %350 = vmatpush1.msra.mxu0 0.0
  %351 = vmatprep.subr.mxu0 0.0
  %352 = vmatpush1.msra.mxu0 0.0
  %353 = vmatprep.subr.mxu0 0.0
  %354 = vmatpush1.msra.mxu0 0.0
  %355 = vmatprep.subr.mxu0 0.0
  %356 = vmatpush1.msra.mxu0 0.0
  %357 = vmatprep.subr.mxu0 0.0
  %358 = vmatpush1.msra.mxu0 0.0
  %359 = vmatprep.subr.mxu0 0.0
  %360 = vmatpush1.msra.mxu0 0.0
  %361 = vmatprep.subr.mxu0 0.0
  %362 = vmatpush1.msra.mxu0 0.0
  %363 = vmatprep.subr.mxu0 0.0
  %364 = vmatpush1.msra.mxu0 0.0
  %365 = vmatprep.subr.mxu0 0.0
  %366 = vmatpush1.msra.mxu0 0.0
  %367 = vmatprep.subr.mxu0 0.0
  %368 = vmatpush1.msra.mxu0 0.0
  %369 = vmatprep.subr.mxu0 0.0
  %370 = vmatpush1.msra.mxu0 0.0
  %371 = vmatprep.subr.mxu0 0.0
  %372 = vmatpush1.msra.mxu0 0.0
  %373 = vmatprep.subr.mxu0 0.0
  %374 = vmatpush1.msra.mxu0 0.0
  %375 = vmatprep.subr.mxu0 0.0
  %376 = vmatpush1.msra.mxu0 0.0
  %377 = vmatprep.mubr.f32.mxu0 0.0
  %378 = vmatmul.mubr.f32.gmra.mrb[0].mxu0 %v311
  %v379 = vpop.f32.mrb[0].mxu0
  %v380 = vadd.f32 0.0, %v379
  %v381 = vpop.f32.mrb[0].mxu0
  %382 = vdwg.mxu0
  %v383 = vadd.f32 %v154, %v380
  %v384 = vmul.f32 %v383, 0.5
  %v385 = vtanh.pop %v384
  %v386 = vadd.f32 %v385, 1.0
  %v387 = vmul.f32 %v386, 0.5
  %v388 = vtanh.pop %v383
  %v389 = vmul.f32 %v387, %v301
  %391 = vrot.lane.b32.xlu0 %v388, 64
  %v392 = vpop.permute.xlu0 %391
  %v394 = vmul.f32 %v387, %v392
  %396 = vrot.lane.b32.xlu0 %v394, 32
  %v397 = vpop.permute.xlu0 %396
  %v399 = vadd.f32 %v389, %v397
  %v400 = vtanh.pop %v399
  %402 = vrot.lane.b32.xlu0 %v400, 64
  %v403 = vpop.permute.xlu0 %402
  %v405 = vmul.f32 %v387, %v403
  %407 = vrot.lane.b32.xlu0 %v405, 32
  %v408 = vpop.permute.xlu0 %407
  %v409 = vsel %vm212, %v408, 0
  %411 = vmatprep.subr.mxu0 0.0
  %412 = vmatpush1.msra.mxu0 %v183
  %413 = vmatprep.subr.mxu0 0.0
  %414 = vmatpush1.msra.mxu0 %v184
  %415 = vmatprep.subr.mxu0 0.0
  %416 = vmatpush1.msra.mxu0 %v185
  %417 = vmatprep.subr.mxu0 0.0
  %418 = vmatpush1.msra.mxu0 %v186
  %419 = vmatprep.subr.mxu0 0.0
  %420 = vmatpush1.msra.mxu0 0.0
  %421 = vmatprep.subr.mxu0 0.0
  %422 = vmatpush1.msra.mxu0 0.0
  %423 = vmatprep.subr.mxu0 0.0
  %424 = vmatpush1.msra.mxu0 0.0
  %425 = vmatprep.subr.mxu0 0.0
  %426 = vmatpush1.msra.mxu0 0.0
  %427 = vmatprep.subr.mxu0 0.0
  %428 = vmatpush1.msra.mxu0 0.0
  %429 = vmatprep.subr.mxu0 0.0
  %430 = vmatpush1.msra.mxu0 0.0
  %431 = vmatprep.subr.mxu0 0.0
  %432 = vmatpush1.msra.mxu0 0.0
  %433 = vmatprep.subr.mxu0 0.0
  %434 = vmatpush1.msra.mxu0 0.0
  %435 = vmatprep.subr.mxu0 0.0
  %436 = vmatpush1.msra.mxu0 0.0
  %437 = vmatprep.subr.mxu0 0.0
  %438 = vmatpush1.msra.mxu0 0.0
  %439 = vmatprep.subr.mxu0 0.0
  %440 = vmatpush1.msra.mxu0 0.0
  %441 = vmatprep.subr.mxu0 0.0
  %442 = vmatpush1.msra.mxu0 0.0
  %443 = vmatprep.subr.mxu0 0.0
  %444 = vmatpush1.msra.mxu0 0.0
  %445 = vmatprep.subr.mxu0 0.0
  %446 = vmatpush1.msra.mxu0 0.0
  %447 = vmatprep.subr.mxu0 0.0
  %448 = vmatpush1.msra.mxu0 0.0
  %449 = vmatprep.subr.mxu0 0.0
  %450 = vmatpush1.msra.mxu0 0.0
  %451 = vmatprep.subr.mxu0 0.0
  %452 = vmatpush1.msra.mxu0 0.0
  %453 = vmatprep.subr.mxu0 0.0
  %454 = vmatpush1.msra.mxu0 0.0
  %455 = vmatprep.subr.mxu0 0.0
  %456 = vmatpush1.msra.mxu0 0.0
  %457 = vmatprep.subr.mxu0 0.0
  %458 = vmatpush1.msra.mxu0 0.0
  %459 = vmatprep.subr.mxu0 0.0
  %460 = vmatpush1.msra.mxu0 0.0
  %461 = vmatprep.subr.mxu0 0.0
  %462 = vmatpush1.msra.mxu0 0.0
  %463 = vmatprep.subr.mxu0 0.0
  %464 = vmatpush1.msra.mxu0 0.0
  %465 = vmatprep.subr.mxu0 0.0
  %466 = vmatpush1.msra.mxu0 0.0
  %467 = vmatprep.subr.mxu0 0.0
  %468 = vmatpush1.msra.mxu0 0.0
  %469 = vmatprep.subr.mxu0 0.0
  %470 = vmatpush1.msra.mxu0 0.0
  %471 = vmatprep.subr.mxu0 0.0
  %472 = vmatpush1.msra.mxu0 0.0
  %473 = vmatprep.subr.mxu0 0.0
  %474 = vmatpush1.msra.mxu0 0.0
  %475 = vmatprep.mubr.f32.mxu0 0.0
  %476 = vmatmul.mubr.f32.gmra.mrb[0].mxu0 %v409
  %v477 = vpop.f32.mrb[0].mxu0
  %v478 = vadd.f32 0.0, %v477
  %v479 = vpop.f32.mrb[0].mxu0
  %480 = vdwg.mxu0
  %v481 = vadd.f32 %v159, %v478
  %v482 = vmul.f32 %v481, 0.5
  %v483 = vtanh.pop %v482
  %v484 = vadd.f32 %v483, 1.0
  %v485 = vmul.f32 %v484, 0.5
  %v486 = vtanh.pop %v481
  %v487 = vmul.f32 %v485, %v399
  %489 = vrot.lane.b32.xlu0 %v486, 64
  %v490 = vpop.permute.xlu0 %489
  %v492 = vmul.f32 %v485, %v490
  %494 = vrot.lane.b32.xlu0 %v492, 32
  %v495 = vpop.permute.xlu0 %494
  %v497 = vadd.f32 %v487, %v495
  %v498 = vtanh.pop %v497
  %500 = vrot.lane.b32.xlu0 %v498, 64
  %v501 = vpop.permute.xlu0 %500
  %v503 = vmul.f32 %v485, %v501
  %505 = vrot.lane.b32.xlu0 %v503, 32
  %v506 = vpop.permute.xlu0 %505
  %v507 = vsel %vm212, %v506, 0
  %509 = vmatprep.subr.mxu0 0.0
  %510 = vmatpush1.msra.mxu0 %v183
  %511 = vmatprep.subr.mxu0 0.0
  %512 = vmatpush1.msra.mxu0 %v184
  %513 = vmatprep.subr.mxu0 0.0
  %514 = vmatpush1.msra.mxu0 %v185
  %515 = vmatprep.subr.mxu0 0.0
  %516 = vmatpush1.msra.mxu0 %v186
  %517 = vmatprep.subr.mxu0 0.0
  %518 = vmatpush1.msra.mxu0 0.0
  %519 = vmatprep.subr.mxu0 0.0
  %520 = vmatpush1.msra.mxu0 0.0
  %521 = vmatprep.subr.mxu0 0.0
  %522 = vmatpush1.msra.mxu0 0.0
  %523 = vmatprep.subr.mxu0 0.0
  %524 = vmatpush1.msra.mxu0 0.0
  %525 = vmatprep.subr.mxu0 0.0
  %526 = vmatpush1.msra.mxu0 0.0
  %527 = vmatprep.subr.mxu0 0.0
  %528 = vmatpush1.msra.mxu0 0.0
  %529 = vmatprep.subr.mxu0 0.0
  %530 = vmatpush1.msra.mxu0 0.0
  %531 = vmatprep.subr.mxu0 0.0
  %532 = vmatpush1.msra.mxu0 0.0
  %533 = vmatprep.subr.mxu0 0.0
  %534 = vmatpush1.msra.mxu0 0.0
  %535 = vmatprep.subr.mxu0 0.0
  %536 = vmatpush1.msra.mxu0 0.0
  %537 = vmatprep.subr.mxu0 0.0
  %538 = vmatpush1.msra.mxu0 0.0
  %539 = vmatprep.subr.mxu0 0.0
  %540 = vmatpush1.msra.mxu0 0.0
  %541 = vmatprep.subr.mxu0 0.0
  %542 = vmatpush1.msra.mxu0 0.0
  %543 = vmatprep.subr.mxu0 0.0
  %544 = vmatpush1.msra.mxu0 0.0
  %545 = vmatprep.subr.mxu0 0.0
  %546 = vmatpush1.msra.mxu0 0.0
  %547 = vmatprep.subr.mxu0 0.0
  %548 = vmatpush1.msra.mxu0 0.0
  %549 = vmatprep.subr.mxu0 0.0
  %550 = vmatpush1.msra.mxu0 0.0
  %551 = vmatprep.subr.mxu0 0.0
  %552 = vmatpush1.msra.mxu0 0.0
  %553 = vmatprep.subr.mxu0 0.0
  %554 = vmatpush1.msra.mxu0 0.0
  %555 = vmatprep.subr.mxu0 0.0
  %556 = vmatpush1.msra.mxu0 0.0
  %557 = vmatprep.subr.mxu0 0.0
  %558 = vmatpush1.msra.mxu0 0.0
  %559 = vmatprep.subr.mxu0 0.0
  %560 = vmatpush1.msra.mxu0 0.0
  %561 = vmatprep.subr.mxu0 0.0
  %562 = vmatpush1.msra.mxu0 0.0
  %563 = vmatprep.subr.mxu0 0.0
  %564 = vmatpush1.msra.mxu0 0.0
  %565 = vmatprep.subr.mxu0 0.0
  %566 = vmatpush1.msra.mxu0 0.0
  %567 = vmatprep.subr.mxu0 0.0
  %568 = vmatpush1.msra.mxu0 0.0
  %569 = vmatprep.subr.mxu0 0.0
  %570 = vmatpush1.msra.mxu0 0.0
  %571 = vmatprep.subr.mxu0 0.0
  %572 = vmatpush1.msra.mxu0 0.0
  %573 = vmatprep.mubr.f32.mxu0 0.0
  %574 = vmatmul.mubr.f32.gmra.mrb[0].mxu0 %v507
  %v575 = vpop.f32.mrb[0].mxu0
  %v576 = vadd.f32 0.0, %v575
  %v577 = vpop.f32.mrb[0].mxu0
  %578 = vdwg.mxu0
  %v579 = vadd.f32 %v164, %v576
  %v580 = vmul.f32 %v579, 0.5
  %v581 = vtanh.pop %v580
  %v582 = vadd.f32 %v581, 1.0
  %v583 = vmul.f32 %v582, 0.5
  %v584 = vtanh.pop %v579
  %v585 = vmul.f32 %v583, %v497
  %587 = vrot.lane.b32.xlu0 %v584, 64
  %v588 = vpop.permute.xlu0 %587
  %v590 = vmul.f32 %v583, %v588
  %592 = vrot.lane.b32.xlu0 %v590, 32
  %v593 = vpop.permute.xlu0 %592
  %v595 = vadd.f32 %v585, %v593
  %v596 = vtanh.pop %v595
  %598 = vrot.lane.b32.xlu0 %v596, 64
  %v599 = vpop.permute.xlu0 %598
  %v601 = vmul.f32 %v583, %v599
  %603 = vrot.lane.b32.xlu0 %v601, 32
  %v604 = vpop.permute.xlu0 %603
  %v605 = vsel %vm212, %v604, 0
  %607 = vmatprep.subr.mxu0 0.0
  %608 = vmatpush1.msra.mxu0 %v183
  %609 = vmatprep.subr.mxu0 0.0
  %610 = vmatpush1.msra.mxu0 %v184
  %611 = vmatprep.subr.mxu0 0.0
  %612 = vmatpush1.msra.mxu0 %v185
  %613 = vmatprep.subr.mxu0 0.0
  %614 = vmatpush1.msra.mxu0 %v186
  %615 = vmatprep.subr.mxu0 0.0
  %616 = vmatpush1.msra.mxu0 0.0
  %617 = vmatprep.subr.mxu0 0.0
  %618 = vmatpush1.msra.mxu0 0.0
  %619 = vmatprep.subr.mxu0 0.0
  %620 = vmatpush1.msra.mxu0 0.0
  %621 = vmatprep.subr.mxu0 0.0
  %622 = vmatpush1.msra.mxu0 0.0
  %623 = vmatprep.subr.mxu0 0.0
  %624 = vmatpush1.msra.mxu0 0.0
  %625 = vmatprep.subr.mxu0 0.0
  %626 = vmatpush1.msra.mxu0 0.0
  %627 = vmatprep.subr.mxu0 0.0
  %628 = vmatpush1.msra.mxu0 0.0
  %629 = vmatprep.subr.mxu0 0.0
  %630 = vmatpush1.msra.mxu0 0.0
  %631 = vmatprep.subr.mxu0 0.0
  %632 = vmatpush1.msra.mxu0 0.0
  %633 = vmatprep.subr.mxu0 0.0
  %634 = vmatpush1.msra.mxu0 0.0
  %635 = vmatprep.subr.mxu0 0.0
  %636 = vmatpush1.msra.mxu0 0.0
  %637 = vmatprep.subr.mxu0 0.0
  %638 = vmatpush1.msra.mxu0 0.0
  %639 = vmatprep.subr.mxu0 0.0
  %640 = vmatpush1.msra.mxu0 0.0
  %641 = vmatprep.subr.mxu0 0.0
  %642 = vmatpush1.msra.mxu0 0.0
  %643 = vmatprep.subr.mxu0 0.0
  %644 = vmatpush1.msra.mxu0 0.0
  %645 = vmatprep.subr.mxu0 0.0
  %646 = vmatpush1.msra.mxu0 0.0
  %647 = vmatprep.subr.mxu0 0.0
  %648 = vmatpush1.msra.mxu0 0.0
  %649 = vmatprep.subr.mxu0 0.0
  %650 = vmatpush1.msra.mxu0 0.0
  %651 = vmatprep.subr.mxu0 0.0
  %652 = vmatpush1.msra.mxu0 0.0
  %653 = vmatprep.subr.mxu0 0.0
  %654 = vmatpush1.msra.mxu0 0.0
  %655 = vmatprep.subr.mxu0 0.0
  %656 = vmatpush1.msra.mxu0 0.0
  %657 = vmatprep.subr.mxu0 0.0
  %658 = vmatpush1.msra.mxu0 0.0
  %659 = vmatprep.subr.mxu0 0.0
  %660 = vmatpush1.msra.mxu0 0.0
  %661 = vmatprep.subr.mxu0 0.0
  %662 = vmatpush1.msra.mxu0 0.0
  %663 = vmatprep.subr.mxu0 0.0
  %664 = vmatpush1.msra.mxu0 0.0
  %665 = vmatprep.subr.mxu0 0.0
  %666 = vmatpush1.msra.mxu0 0.0
  %667 = vmatprep.subr.mxu0 0.0
  %668 = vmatpush1.msra.mxu0 0.0
  %669 = vmatprep.subr.mxu0 0.0
  %670 = vmatpush1.msra.mxu0 0.0
  %671 = vmatprep.mubr.f32.mxu0 0.0
  %672 = vmatmul.mubr.f32.gmra.mrb[0].mxu0 %v605
  %v673 = vpop.f32.mrb[0].mxu0
  %v674 = vadd.f32 0.0, %v673
  %v675 = vpop.f32.mrb[0].mxu0
  %676 = vdwg.mxu0
  %v677 = vadd.f32 %v169, %v674
  %v678 = vmul.f32 %v677, 0.5
  %v679 = vtanh.pop %v678
  %v680 = vadd.f32 %v679, 1.0
  %v681 = vmul.f32 %v680, 0.5
  %v682 = vtanh.pop %v677
  %v683 = vmul.f32 %v681, %v595
  %685 = vrot.lane.b32.xlu0 %v682, 64
  %v686 = vpop.permute.xlu0 %685
  %v688 = vmul.f32 %v681, %v686
  %690 = vrot.lane.b32.xlu0 %v688, 32
  %v691 = vpop.permute.xlu0 %690
  %v693 = vadd.f32 %v683, %v691
  %v694 = vtanh.pop %v693
  %696 = vrot.lane.b32.xlu0 %v694, 64
  %v697 = vpop.permute.xlu0 %696
  %v699 = vmul.f32 %v681, %v697
  %701 = vrot.lane.b32.xlu0 %v699, 32
  %v702 = vpop.permute.xlu0 %701
  %v703 = vsel %vm212, %v702, 0
  %705 = vmatprep.subr.mxu0 0.0
  %706 = vmatpush1.msra.mxu0 %v183
  %707 = vmatprep.subr.mxu0 0.0
  %708 = vmatpush1.msra.mxu0 %v184
  %709 = vmatprep.subr.mxu0 0.0
  %710 = vmatpush1.msra.mxu0 %v185
  %711 = vmatprep.subr.mxu0 0.0
  %712 = vmatpush1.msra.mxu0 %v186
  %713 = vmatprep.subr.mxu0 0.0
  %714 = vmatpush1.msra.mxu0 0.0
  %715 = vmatprep.subr.mxu0 0.0
  %716 = vmatpush1.msra.mxu0 0.0
  %717 = vmatprep.subr.mxu0 0.0
  %718 = vmatpush1.msra.mxu0 0.0
  %719 = vmatprep.subr.mxu0 0.0
  %720 = vmatpush1.msra.mxu0 0.0
  %721 = vmatprep.subr.mxu0 0.0
  %722 = vmatpush1.msra.mxu0 0.0
  %723 = vmatprep.subr.mxu0 0.0
  %724 = vmatpush1.msra.mxu0 0.0
  %725 = vmatprep.subr.mxu0 0.0
  %726 = vmatpush1.msra.mxu0 0.0
  %727 = vmatprep.subr.mxu0 0.0
  %728 = vmatpush1.msra.mxu0 0.0
  %729 = vmatprep.subr.mxu0 0.0
  %730 = vmatpush1.msra.mxu0 0.0
  %731 = vmatprep.subr.mxu0 0.0
  %732 = vmatpush1.msra.mxu0 0.0
  %733 = vmatprep.subr.mxu0 0.0
  %734 = vmatpush1.msra.mxu0 0.0
  %735 = vmatprep.subr.mxu0 0.0
  %736 = vmatpush1.msra.mxu0 0.0
  %737 = vmatprep.subr.mxu0 0.0
  %738 = vmatpush1.msra.mxu0 0.0
  %739 = vmatprep.subr.mxu0 0.0
  %740 = vmatpush1.msra.mxu0 0.0
  %741 = vmatprep.subr.mxu0 0.0
  %742 = vmatpush1.msra.mxu0 0.0
  %743 = vmatprep.subr.mxu0 0.0
  %744 = vmatpush1.msra.mxu0 0.0
  %745 = vmatprep.subr.mxu0 0.0
  %746 = vmatpush1.msra.mxu0 0.0
  %747 = vmatprep.subr.mxu0 0.0
  %748 = vmatpush1.msra.mxu0 0.0
  %749 = vmatprep.subr.mxu0 0.0
  %750 = vmatpush1.msra.mxu0 0.0
  %751 = vmatprep.subr.mxu0 0.0
  %752 = vmatpush1.msra.mxu0 0.0
  %753 = vmatprep.subr.mxu0 0.0
  %754 = vmatpush1.msra.mxu0 0.0
  %755 = vmatprep.subr.mxu0 0.0
  %756 = vmatpush1.msra.mxu0 0.0
  %757 = vmatprep.subr.mxu0 0.0
  %758 = vmatpush1.msra.mxu0 0.0
  %759 = vmatprep.subr.mxu0 0.0
  %760 = vmatpush1.msra.mxu0 0.0
  %761 = vmatprep.subr.mxu0 0.0
  %762 = vmatpush1.msra.mxu0 0.0
  %763 = vmatprep.subr.mxu0 0.0
  %764 = vmatpush1.msra.mxu0 0.0
  %765 = vmatprep.subr.mxu0 0.0
  %766 = vmatpush1.msra.mxu0 0.0
  %767 = vmatprep.subr.mxu0 0.0
  %768 = vmatpush1.msra.mxu0 0.0
  %769 = vmatprep.mubr.f32.mxu0 0.0
  %770 = vmatmul.mubr.f32.gmra.mrb[0].mxu0 %v703
  %v771 = vpop.f32.mrb[0].mxu0
  %v772 = vadd.f32 0.0, %v771
  %v773 = vpop.f32.mrb[0].mxu0
  %774 = vdwg.mxu0
  %v775 = vadd.f32 %v174, %v772
  %v776 = vmul.f32 %v775, 0.5
  %v777 = vtanh.pop %v776
  %v778 = vadd.f32 %v777, 1.0
  %v779 = vmul.f32 %v778, 0.5
  %v780 = vtanh.pop %v775
  %v781 = vmul.f32 %v779, %v693
  %783 = vrot.lane.b32.xlu0 %v780, 64
  %v784 = vpop.permute.xlu0 %783
  %v786 = vmul.f32 %v779, %v784
  %788 = vrot.lane.b32.xlu0 %v786, 32
  %v789 = vpop.permute.xlu0 %788
  %v791 = vadd.f32 %v781, %v789
  %v792 = vtanh.pop %v791
  %794 = vrot.lane.b32.xlu0 %v792, 64
  %v795 = vpop.permute.xlu0 %794
  %v797 = vmul.f32 %v779, %v795
  %799 = vrot.lane.b32.xlu0 %v797, 32
  %v800 = vpop.permute.xlu0 %799
  %v801 = vsel %vm212, %v800, 0
  %803 = vmatprep.subr.mxu0 0.0
  %804 = vmatpush1.msra.mxu0 %v183
  %805 = vmatprep.subr.mxu0 0.0
  %806 = vmatpush1.msra.mxu0 %v184
  %807 = vmatprep.subr.mxu0 0.0
  %808 = vmatpush1.msra.mxu0 %v185
  %809 = vmatprep.subr.mxu0 0.0
  %810 = vmatpush1.msra.mxu0 %v186
  %811 = vmatprep.subr.mxu0 0.0
  %812 = vmatpush1.msra.mxu0 0.0
  %813 = vmatprep.subr.mxu0 0.0
  %814 = vmatpush1.msra.mxu0 0.0
  %815 = vmatprep.subr.mxu0 0.0
  %816 = vmatpush1.msra.mxu0 0.0
  %817 = vmatprep.subr.mxu0 0.0
  %818 = vmatpush1.msra.mxu0 0.0
  %819 = vmatprep.subr.mxu0 0.0
  %820 = vmatpush1.msra.mxu0 0.0
  %821 = vmatprep.subr.mxu0 0.0
  %822 = vmatpush1.msra.mxu0 0.0
  %823 = vmatprep.subr.mxu0 0.0
  %824 = vmatpush1.msra.mxu0 0.0
  %825 = vmatprep.subr.mxu0 0.0
  %826 = vmatpush1.msra.mxu0 0.0
  %827 = vmatprep.subr.mxu0 0.0
  %828 = vmatpush1.msra.mxu0 0.0
  %829 = vmatprep.subr.mxu0 0.0
  %830 = vmatpush1.msra.mxu0 0.0
  %831 = vmatprep.subr.mxu0 0.0
  %832 = vmatpush1.msra.mxu0 0.0
  %833 = vmatprep.subr.mxu0 0.0
  %834 = vmatpush1.msra.mxu0 0.0
  %835 = vmatprep.subr.mxu0 0.0
  %836 = vmatpush1.msra.mxu0 0.0
  %837 = vmatprep.subr.mxu0 0.0
  %838 = vmatpush1.msra.mxu0 0.0
  %839 = vmatprep.subr.mxu0 0.0
  %840 = vmatpush1.msra.mxu0 0.0
  %841 = vmatprep.subr.mxu0 0.0
  %842 = vmatpush1.msra.mxu0 0.0
  %843 = vmatprep.subr.mxu0 0.0
  %844 = vmatpush1.msra.mxu0 0.0
  %845 = vmatprep.subr.mxu0 0.0
  %846 = vmatpush1.msra.mxu0 0.0
  %847 = vmatprep.subr.mxu0 0.0
  %848 = vmatpush1.msra.mxu0 0.0
  %849 = vmatprep.subr.mxu0 0.0
  %850 = vmatpush1.msra.mxu0 0.0
  %851 = vmatprep.subr.mxu0 0.0
  %852 = vmatpush1.msra.mxu0 0.0
  %853 = vmatprep.subr.mxu0 0.0
  %854 = vmatpush1.msra.mxu0 0.0
  %855 = vmatprep.subr.mxu0 0.0
  %856 = vmatpush1.msra.mxu0 0.0
  %857 = vmatprep.subr.mxu0 0.0
  %858 = vmatpush1.msra.mxu0 0.0
  %859 = vmatprep.subr.mxu0 0.0
  %860 = vmatpush1.msra.mxu0 0.0
  %861 = vmatprep.subr.mxu0 0.0
  %862 = vmatpush1.msra.mxu0 0.0
  %863 = vmatprep.subr.mxu0 0.0
  %864 = vmatpush1.msra.mxu0 0.0
  %865 = vmatprep.subr.mxu0 0.0
  %866 = vmatpush1.msra.mxu0 0.0
  %867 = vmatprep.mubr.f32.mxu0 0.0
  %868 = vmatmul.mubr.f32.gmra.mrb[0].mxu0 %v801
  %v869 = vpop.f32.mrb[0].mxu0
  %v870 = vadd.f32 0.0, %v869
  %v871 = vpop.f32.mrb[0].mxu0
  %872 = vdwg.mxu0
  %v873 = vadd.f32 %v179, %v870
  %v874 = vmul.f32 %v873, 0.5
  %v875 = vtanh.pop %v874
  %v876 = vadd.f32 %v875, 1.0
  %v877 = vmul.f32 %v876, 0.5
  %v878 = vtanh.pop %v873
  %v879 = vmul.f32 %v877, %v791
  %881 = vrot.lane.b32.xlu0 %v878, 64
  %v882 = vpop.permute.xlu0 %881
  %v884 = vmul.f32 %v877, %v882
  %886 = vrot.lane.b32.xlu0 %v884, 32
  %v887 = vpop.permute.xlu0 %886
  %v889 = vadd.f32 %v879, %v887
  %v890 = vtanh.pop %v889
  %892 = vrot.lane.b32.xlu0 %v890, 64
  %v893 = vpop.permute.xlu0 %892
  %v895 = vmul.f32 %v877, %v893
  %v896 = vmul.f32 %v181, 0.5
  %v897 = vtanh.pop %v896
  %v898 = vadd.f32 %v897, 1.0
  %v899 = vmul.f32 %v898, 0.5
  %v900 = vtanh.pop %v181
  %v901 = vmul.f32 %v899, 0.0
  %903 = vrot.lane.b32.xlu0 %v900, 64
  %v904 = vpop.permute.xlu0 %903
  %v906 = vmul.f32 %v899, %v904
  %908 = vrot.lane.b32.xlu0 %v906, 32
  %v909 = vpop.permute.xlu0 %908
  %v911 = vadd.f32 %v901, %v909
  %v912 = vtanh.pop %v911
  %914 = vrot.lane.b32.xlu0 %v912, 64
  %v915 = vpop.permute.xlu0 %914
  %v917 = vmul.f32 %v899, %v915
  %v918 = vld [vmem:[%s4] sm:$0x1]
  %v920 = vlaneseq
  %v921 = vshrl.u32 %v920, 7
  %v922 = vsub.s32 0, %v921
  %v923 = vrot.slane %v918, %v922
  %924 = vrot.lane.b32.xlu0 %v923, 96
  %v925 = vpop.permute.xlu0 %924
  %v927 = vmul.f32 %v895, %v925
  %v928 = vld [vmem:[%s5] sm:$0x1]
  %v930 = vlaneseq
  %v931 = vshrl.u32 %v930, 7
  %v932 = vsub.s32 0, %v931
  %v933 = vrot.slane %v928, %v932
  %934 = vrot.lane.b32.xlu0 %v933, 96
  %v935 = vpop.permute.xlu0 %934
  %v937 = vmul.f32 %v917, %v935
  %v938 = vadd.f32 %v927, %v937
  %940 = vrot.lane.b32.xlu0 %v938, 32
  %v941 = vpop.permute.xlu0 %940
  %v943 = vsel %vm212, %v941, 0.0
  %944 = vadd.xlane.f32.xlu0 %v943
  %v945 = vpop.xlane.xlu0 %944
  %v946 = vld [vmem:[#allocation2] sm:$0x1]
  %v948 = vlaneseq
  %v949 = vshrl.u32 %v948, 7
  %v950 = vsub.s32 0, %v949
  %v951 = vrot.slane %v946, %v950
  %v953 = vadd.f32 %v945, %v951
  %vm954 = vcmask 1024
  %955 = vst.msk [vmem:[%s7] sm:$0x3] %vm954, %v953
  // Predicated region
  $region30: #{bilstm_binary_classifier_forward.1} parent=0 // pred_check
    _
  $region31: #{bilstm_binary_classifier_forward.1} parent=0 // pred_check_branch
    %957 = sbr.rel (0) target = $region33
  $region32: #{bilstm_binary_classifier_forward.1} parent=0 // pred_region
    _
  $region33: #{bilstm_binary_classifier_forward.1} parent=0 // pred_fallthru
    _
  // Predicated region
  $region34: #{bilstm_binary_classifier_forward.1} parent=0 // pred_check
    _
  $region35: #{bilstm_binary_classifier_forward.1} parent=0 // pred_check_branch
    %959 = sbr.rel (0) target = $region37
  $region36: #{bilstm_binary_classifier_forward.1} parent=0 // pred_region
    _
  $region37: #{bilstm_binary_classifier_forward.1} parent=0 // pred_fallthru
    _

</llo_original>
